<compile_context>
chip_gen: v7x
topology: tpu7x:2x2x1
jax: 0.10.0
libtpu: 0.0.40
codegen_flags: <defaults>
</compile_context>

<pallas_src>
import functools

import jax
import jax.numpy as jnp
from jax import lax
from jax.experimental import pallas as pl
from jax.experimental.pallas import tpu as pltpu


HEAD_PAD = 128  # fused head width: [policy (A cols) | value (1 col) | zero pad]


def _round_up(n, m):
    return ((n + m - 1) // m) * m


def _mlp_kernel(x_ref, w1_ref, b1_ref, w2_ref, b2_ref, wh_ref, bh_ref,
                out_ref, *, num_actions):
    """Fused MLP forward for one batch tile.

    x_ref: (Bt, D) bf16, weights bf16, biases f32.
    out_ref: (Bt, HEAD_PAD) f32 where cols [0, A) = log_softmax(pi),
             col A = tanh(v), cols > A = zero padding.
    """
    # layer1 + ReLU (bf16 matmul operands, f32 accumulation & elementwise)
    h1 = jnp.dot(x_ref[...], w1_ref[...], preferred_element_type=jnp.float32)
    h1 = jnp.maximum(h1 + b1_ref[...], 0.0)                      # (Bt, H1) f32

    # layer2 + ReLU
    h2 = jnp.dot(h1.astype(w2_ref.dtype), w2_ref[...],
                 preferred_element_type=jnp.float32)
    h2 = jnp.maximum(h2 + b2_ref[...], 0.0)                      # (Bt, H2) f32

    # Fused [policy | value | pad] head: one lane-dense 128-wide matmul.
    head = jnp.dot(h2.astype(wh_ref.dtype), wh_ref[...],
                   preferred_element_type=jnp.float32)
    head = head + bh_ref[...]                                    # (Bt, 128) f32

    col = lax.broadcasted_iota(jnp.int32, head.shape, 1)
    is_pi = col < num_actions

    # Numerically stable log_softmax over the first `num_actions` columns.
    pi_max = jnp.max(jnp.where(is_pi, head, -jnp.inf), axis=-1, keepdims=True)
    shifted = jnp.where(is_pi, head - pi_max, -jnp.inf)
    lse = jnp.log(jnp.sum(jnp.exp(shifted), axis=-1, keepdims=True))
    log_pi = shifted - lse                                       # -inf in pad cols

    v_or_pad = jnp.where(col == num_actions, jnp.tanh(head), 0.0)
    out_ref[...] = jnp.where(is_pi, log_pi, v_or_pad).astype(out_ref.dtype)


@jax.jit
def mlp_net_forward(x, params):
    """x: (B, H, W) float32. params: dict of weights/biases, (in, out) layout.

    Returns (log_softmax(pi): (B, A) f32, tanh(v): (B, 1) f32).
    """
    B = x.shape[0]
    x_flat = x.reshape(B, -1).astype(jnp.float32)                # (B, D)
    D = x_flat.shape[1]

    w1, b1 = params["w1"], params["b1"]
    w2, b2 = params["w2"], params["b2"]
    wp, bp = params["wp"], params["bp"]
    wv, bv = params["wv"], params["bv"]
    H1, H2, A = w1.shape[1], w2.shape[1], wp.shape[1]

    # Fuse policy + value heads into one zero-padded (H2, 128) weight / bias.
    w_head = jnp.zeros((H2, HEAD_PAD), jnp.float32)
    w_head = w_head.at[:, :A].set(wp).at[:, A:A + 1].set(wv)
    b_head = jnp.zeros((1, HEAD_PAD), jnp.float32)
    b_head = b_head.at[:, :A].set(bp).at[:, A:A + 1].set(bv)

    # bf16 matmul operands (kernel accumulates in f32); biases stay f32.
    x_bf = x_flat.astype(jnp.bfloat16)
    w1_bf = w1.astype(jnp.bfloat16)
    w2_bf = w2.astype(jnp.bfloat16)
    wh_bf = w_head.astype(jnp.bfloat16)
    b1_f = b1.astype(jnp.float32)
    b2_f = b2.astype(jnp.float32)
    bh_f = b_head.astype(jnp.float32)

    # Pad batch to a sublane multiple and tile it over the grid; weights are
    # DMA'd once and stay resident across all batch tiles.
    B_TILE = min(256, _round_up(B, 8))
    pB = _round_up(B, B_TILE)
    x_bf = jnp.pad(x_bf, ((0, pB - B), (0, 0)))

    flops = 2 * pB * (D * H1 + H1 * H2 + H2 * HEAD_PAD)
    transcendentals = 2 * pB * HEAD_PAD                          # exp + tanh
    bytes_accessed = (
        x_bf.size * 2 + w1_bf.size * 2 + w2_bf.size * 2 + wh_bf.size * 2
        + (b1_f.size + b2_f.size + bh_f.size) * 4
        + pB * HEAD_PAD * 4)

    out = pl.pallas_call(
        functools.partial(_mlp_kernel, num_actions=A),
        out_shape=jax.ShapeDtypeStruct((pB, HEAD_PAD), jnp.float32),
        grid=(pB // B_TILE,),
        in_specs=[
            pl.BlockSpec((B_TILE, D), lambda i: (i, 0)),         # x (tiled on B)
            pl.BlockSpec((D, H1), lambda i: (0, 0)),             # w1 (resident)
            pl.BlockSpec((1, H1), lambda i: (0, 0)),             # b1
            pl.BlockSpec((H1, H2), lambda i: (0, 0)),            # w2
            pl.BlockSpec((1, H2), lambda i: (0, 0)),             # b2
            pl.BlockSpec((H2, HEAD_PAD), lambda i: (0, 0)),      # fused head W
            pl.BlockSpec((1, HEAD_PAD), lambda i: (0, 0)),       # fused head b
        ],
        out_specs=pl.BlockSpec((B_TILE, HEAD_PAD), lambda i: (i, 0)),
        compiler_params=pltpu.CompilerParams(
            dimension_semantics=("parallel",)),
        cost_estimate=pl.CostEstimate(
            flops=flops, transcendentals=transcendentals,
            bytes_accessed=bytes_accessed),
    )(x_bf, w1_bf, b1_f, w2_bf, b2_f, wh_bf, bh_f)

    log_pi = out[:B, :A]
    v = out[:B, A:A + 1]
    return log_pi, v


def init_params(key, input_dim, hidden, action_space_size):
    """PyTorch-Linear-like uniform init (bound = 1/sqrt(fan_in) for W and b)."""
    h1, h2 = hidden
    layers = [("1", input_dim, h1), ("2", h1, h2),
              ("p", h2, action_space_size), ("v", h2, 1)]
    params = {}
    for name, fan_in, fan_out in layers:
        key, wk, bk = jax.random.split(key, 3)
        bound = 1.0 / jnp.sqrt(jnp.float32(fan_in))
        params["w" + name] = jax.random.uniform(
            wk, (fan_in, fan_out), jnp.float32, minval=-bound, maxval=bound)
        params["b" + name] = jax.random.uniform(
            bk, (1, fan_out), jnp.float32, minval=-bound, maxval=bound)
    return params


if __name__ == "__main__":
    # Small shapes consistent with the module: obs (8, 8), batch 2,
    # linear_hidden [256, 128] (config default), action space 10.
    B = 2
    OBS = (8, 8)
    HIDDEN = [256, 128]
    ACTIONS = 10
    INPUT_DIM = OBS[0] * OBS[1]

    key = jax.random.PRNGKey(0)
    key, xk = jax.random.split(key)
    x = jax.random.normal(xk, (B, OBS[0], OBS[1]), dtype=jnp.float32)
    params = init_params(key, INPUT_DIM, HIDDEN, ACTIONS)

    log_pi, v = mlp_net_forward(x, params)
    jax.block_until_ready((log_pi, v))

    # Reference with the same bf16 matmul operands / f32 accumulation.
    xf = x.reshape(B, -1).astype(jnp.bfloat16)
    w1b = params["w1"].astype(jnp.bfloat16)
    w2b = params["w2"].astype(jnp.bfloat16)
    wpb = params["wp"].astype(jnp.bfloat16)
    wvb = params["wv"].astype(jnp.bfloat16)
    h1 = jnp.maximum(
        jnp.dot(xf, w1b, preferred_element_type=jnp.float32) + params["b1"], 0.0)
    h2 = jnp.maximum(
        jnp.dot(h1.astype(jnp.bfloat16), w2b,
                preferred_element_type=jnp.float32) + params["b2"], 0.0)
    pi = jnp.dot(h2.astype(jnp.bfloat16), wpb,
                 preferred_element_type=jnp.float32) + params["bp"]
    ref_logpi = pi - jax.scipy.special.logsumexp(pi, axis=1, keepdims=True)
    ref_v = jnp.tanh(
        jnp.dot(h2.astype(jnp.bfloat16), wvb,
                preferred_element_type=jnp.float32) + params["bv"])

    assert log_pi.shape == (B, ACTIONS) and v.shape == (B, 1)
    assert jnp.allclose(log_pi, ref_logpi, atol=1e-4, rtol=1e-4)
    assert jnp.allclose(v, ref_v, atol=1e-4, rtol=1e-4)

    print("KERNEL_OK")
</pallas_src>

<mosaic_0001>
module attributes {stable_mosaic.version = 11 : i64} {
  func.func @_mlp_kernel(%arg0: i32, %arg1: memref<8x64xbf16, #tpu.memory_space<vmem>>, %arg2: memref<64x256xbf16, #tpu.memory_space<vmem>>, %arg3: memref<1x256xf32, #tpu.memory_space<vmem>>, %arg4: memref<256x128xbf16, #tpu.memory_space<vmem>>, %arg5: memref<1x128xf32, #tpu.memory_space<vmem>>, %arg6: memref<128x128xbf16, #tpu.memory_space<vmem>>, %arg7: memref<1x128xf32, #tpu.memory_space<vmem>>, %arg8: memref<8x128xf32, #tpu.memory_space<vmem>>) attributes {dimension_semantics = [#tpu.dimension_semantics<parallel>], iteration_bounds = array<i64: 1>, scalar_prefetch = 0 : i64, scratch_operands = 0 : i64, tpu.core_type = #tpu.core_type<tc>, window_params = [{transform_indices = @transform_0, window_bounds = array<i64: 8, 64>}, {pipeline_mode = #tpu.pipeline_mode<synchronous>, transform_indices = @transform_1, window_bounds = array<i64: 64, 256>}, {pipeline_mode = #tpu.pipeline_mode<synchronous>, transform_indices = @transform_2, window_bounds = array<i64: 1, 256>}, {pipeline_mode = #tpu.pipeline_mode<synchronous>, transform_indices = @transform_3, window_bounds = array<i64: 256, 128>}, {pipeline_mode = #tpu.pipeline_mode<synchronous>, transform_indices = @transform_4, window_bounds = array<i64: 1, 128>}, {pipeline_mode = #tpu.pipeline_mode<synchronous>, transform_indices = @transform_5, window_bounds = array<i64: 128, 128>}, {pipeline_mode = #tpu.pipeline_mode<synchronous>, transform_indices = @transform_6, window_bounds = array<i64: 1, 128>}, {transform_indices = @transform_7, window_bounds = array<i64: 8, 128>}]} {
    %c0 = arith.constant 0 : index
    %c0_0 = arith.constant 0 : index
    %0 = vector.load %arg1[%c0, %c0_0] : memref<8x64xbf16, #tpu.memory_space<vmem>>, vector<8x64xbf16>
    %c0_1 = arith.constant 0 : index
    %c0_2 = arith.constant 0 : index
    %1 = vector.load %arg2[%c0_1, %c0_2] : memref<64x256xbf16, #tpu.memory_space<vmem>>, vector<64x256xbf16>
    %cst = arith.constant dense<0.000000e+00> : vector<8x256xf32>
    %2 = tpu.matmul %0, %1, %cst {dimension_numbers = #tpu.dot_dimension_numbers<[1], [0], [0], [1], [0, 0, 1, 1], [], []>} : vector<8x64xbf16>, vector<64x256xbf16>, vector<8x256xf32> -> vector<8x256xf32>
    %c0_3 = arith.constant 0 : index
    %c0_4 = arith.constant 0 : index
    %3 = vector.load %arg3[%c0_3, %c0_4] : memref<1x256xf32, #tpu.memory_space<vmem>>, vector<1x256xf32>
    %4 = vector.broadcast %3 : vector<1x256xf32> to vector<8x256xf32>
    %5 = arith.addf %2, %4 : vector<8x256xf32>
    %cst_5 = arith.constant 0.000000e+00 : f32
    %6 = vector.broadcast %cst_5 : f32 to vector<8x256xf32>
    %7 = arith.maximumf %5, %6 : vector<8x256xf32>
    %8 = arith.truncf %7 : vector<8x256xf32> to vector<8x256xbf16>
    %c0_6 = arith.constant 0 : index
    %c0_7 = arith.constant 0 : index
    %9 = vector.load %arg4[%c0_6, %c0_7] : memref<256x128xbf16, #tpu.memory_space<vmem>>, vector<256x128xbf16>
    %cst_8 = arith.constant dense<0.000000e+00> : vector<8x128xf32>
    %10 = tpu.matmul %8, %9, %cst_8 {dimension_numbers = #tpu.dot_dimension_numbers<[1], [0], [0], [1], [0, 0, 1, 1], [], []>} : vector<8x256xbf16>, vector<256x128xbf16>, vector<8x128xf32> -> vector<8x128xf32>
    %c0_9 = arith.constant 0 : index
    %c0_10 = arith.constant 0 : index
    %11 = vector.load %arg5[%c0_9, %c0_10] : memref<1x128xf32, #tpu.memory_space<vmem>>, vector<1x128xf32>
    %12 = vector.broadcast %11 : vector<1x128xf32> to vector<8x128xf32>
    %13 = arith.addf %10, %12 : vector<8x128xf32>
    %cst_11 = arith.constant 0.000000e+00 : f32
    %14 = vector.broadcast %cst_11 : f32 to vector<8x128xf32>
    %15 = arith.maximumf %13, %14 : vector<8x128xf32>
    %16 = arith.truncf %15 : vector<8x128xf32> to vector<8x128xbf16>
    %c0_12 = arith.constant 0 : index
    %c0_13 = arith.constant 0 : index
    %17 = vector.load %arg6[%c0_12, %c0_13] : memref<128x128xbf16, #tpu.memory_space<vmem>>, vector<128x128xbf16>
    %cst_14 = arith.constant dense<0.000000e+00> : vector<8x128xf32>
    %18 = tpu.matmul %16, %17, %cst_14 {dimension_numbers = #tpu.dot_dimension_numbers<[1], [0], [0], [1], [0, 0, 1, 1], [], []>} : vector<8x128xbf16>, vector<128x128xbf16>, vector<8x128xf32> -> vector<8x128xf32>
    %c0_15 = arith.constant 0 : index
    %c0_16 = arith.constant 0 : index
    %19 = vector.load %arg7[%c0_15, %c0_16] : memref<1x128xf32, #tpu.memory_space<vmem>>, vector<1x128xf32>
    %20 = vector.broadcast %19 : vector<1x128xf32> to vector<8x128xf32>
    %21 = arith.addf %18, %20 : vector<8x128xf32>
    %22 = tpu.iota {dimensions = array<i32: 1>} : vector<8x128xi32>
    %c10_i32 = arith.constant 10 : i32
    %23 = vector.broadcast %c10_i32 : i32 to vector<8x128xi32>
    %24 = arith.cmpi slt, %22, %23 : vector<8x128xi32>
    %cst_17 = arith.constant 0xFF800000 : f32
    %25 = vector.broadcast %cst_17 : f32 to vector<8x128xf32>
    %26 = arith.select %24, %21, %25 : vector<8x128xi1>, vector<8x128xf32>
    %cst_18 = arith.constant dense<0xFF800000> : vector<8xf32>
    %27 = vector.multi_reduction <maximumf>, %26, %cst_18 [1] : vector<8x128xf32> to vector<8xf32>
    %28 = vector.shape_cast %27 : vector<8xf32> to vector<8x1xf32>
    %29 = vector.broadcast %28 : vector<8x1xf32> to vector<8x128xf32>
    %30 = arith.subf %21, %29 : vector<8x128xf32>
    %cst_19 = arith.constant 0xFF800000 : f32
    %31 = vector.broadcast %cst_19 : f32 to vector<8x128xf32>
    %32 = arith.select %24, %30, %31 : vector<8x128xi1>, vector<8x128xf32>
    %33 = math.exp %32 : vector<8x128xf32>
    %cst_20 = arith.constant dense<0.000000e+00> : vector<8xf32>
    %34 = vector.multi_reduction <add>, %33, %cst_20 [1] : vector<8x128xf32> to vector<8xf32>
    %35 = vector.shape_cast %34 : vector<8xf32> to vector<8x1xf32>
    %36 = math.log %35 : vector<8x1xf32>
    %37 = vector.broadcast %36 : vector<8x1xf32> to vector<8x128xf32>
    %38 = arith.subf %32, %37 : vector<8x128xf32>
    %c10_i32_21 = arith.constant 10 : i32
    %39 = vector.broadcast %c10_i32_21 : i32 to vector<8x128xi32>
    %40 = arith.cmpi eq, %22, %39 : vector<8x128xi32>
    %41 = math.tanh %21 : vector<8x128xf32>
    %cst_22 = arith.constant 0.000000e+00 : f32
    %42 = vector.broadcast %cst_22 : f32 to vector<8x128xf32>
    %43 = arith.select %40, %41, %42 : vector<8x128xi1>, vector<8x128xf32>
    %44 = arith.select %24, %38, %43 : vector<8x128xi1>, vector<8x128xf32>
    %c0_23 = arith.constant 0 : index
    %c0_24 = arith.constant 0 : index
    %45 = vector.load %arg8[%c0_23, %c0_24] : memref<8x128xf32, #tpu.memory_space<vmem>>, vector<8x128xf32>
    tpu.vector_store %arg8[%c0_23, %c0_24], %44 {strides = array<i32>} : memref<8x128xf32, #tpu.memory_space<vmem>>, vector<8x128xf32>,
    return
  }
  func.func @transform_0(%arg0: i32) -> (i32, i32) {
    %c0_i32 = arith.constant 0 : i32
    %c0_i32_0 = arith.constant 0 : i32
    return %arg0, %c0_i32 : i32, i32
  }
  func.func @transform_1(%arg0: i32) -> (i32, i32) {
    %c0_i32 = arith.constant 0 : i32
    %c0_i32_0 = arith.constant 0 : i32
    %c0_i32_1 = arith.constant 0 : i32
    return %c0_i32, %c0_i32_0 : i32, i32
  }
  func.func @transform_2(%arg0: i32) -> (i32, i32) {
    %c0_i32 = arith.constant 0 : i32
    %c0_i32_0 = arith.constant 0 : i32
    %c0_i32_1 = arith.constant 0 : i32
    return %c0_i32, %c0_i32_0 : i32, i32
  }
  func.func @transform_3(%arg0: i32) -> (i32, i32) {
    %c0_i32 = arith.constant 0 : i32
    %c0_i32_0 = arith.constant 0 : i32
    %c0_i32_1 = arith.constant 0 : i32
    return %c0_i32, %c0_i32_0 : i32, i32
  }
  func.func @transform_4(%arg0: i32) -> (i32, i32) {
    %c0_i32 = arith.constant 0 : i32
    %c0_i32_0 = arith.constant 0 : i32
    %c0_i32_1 = arith.constant 0 : i32
    return %c0_i32, %c0_i32_0 : i32, i32
  }
  func.func @transform_5(%arg0: i32) -> (i32, i32) {
    %c0_i32 = arith.constant 0 : i32
    %c0_i32_0 = arith.constant 0 : i32
    %c0_i32_1 = arith.constant 0 : i32
    return %c0_i32, %c0_i32_0 : i32, i32
  }
  func.func @transform_6(%arg0: i32) -> (i32, i32) {
    %c0_i32 = arith.constant 0 : i32
    %c0_i32_0 = arith.constant 0 : i32
    %c0_i32_1 = arith.constant 0 : i32
    return %c0_i32, %c0_i32_0 : i32, i32
  }
  func.func @transform_7(%arg0: i32) -> (i32, i32) {
    %c0_i32 = arith.constant 0 : i32
    %c0_i32_0 = arith.constant 0 : i32
    return %arg0, %c0_i32 : i32, i32
  }
}

</mosaic_0001>

<llo_original>
// kernel: mlp_net_forward.1
$region0: #{mlp_net_forward.1}
  #allocation0 [shape = 'u32[]', space=smem, size = 0x4, offset = 0x4, fixed_abs, tag = 'smem constant byte address 0x4 - core index']
  #allocation1 [shape = 'u32[144,128]{1,0:T(1,128)}', space=vmem, size = 0x12000, scoped, tag = 'internal scratch']
  %s0 = inlined_call_operand.vmem [shape: bf16[8,64], index: 0, kind: input, shape index: {}]
  %s1 = inlined_call_operand.vmem [shape: bf16[64,256], index: 1, kind: input, shape index: {}]
  %s2 = inlined_call_operand.vmem [shape: f32[1,256], index: 2, kind: input, shape index: {}]
  %s3 = inlined_call_operand.vmem [shape: bf16[256,128], index: 3, kind: input, shape index: {}]
  %s4 = inlined_call_operand.vmem [shape: f32[1,128], index: 4, kind: input, shape index: {}]
  %s5 = inlined_call_operand.vmem [shape: bf16[128,128], index: 5, kind: input, shape index: {}]
  %s6 = inlined_call_operand.vmem [shape: f32[1,128], index: 6, kind: input, shape index: {}]
  %s7 = inlined_call_operand.vmem [shape: f32[8,128], index: 7, kind: output, shape index: {}]
  %s8 = sld [smem:[#allocation0]]
  $region38: #{mlp_net_forward.1} parent=0
    _
  %s10 = ssub.s32 1, %s8
  %s11 = scalar_select 0, %s10, %s8
  // Predicated region
  $region2: #{mlp_net_forward.1} parent=0 // pred_check
    _
  $region3: #{mlp_net_forward.1} parent=0 // pred_check_branch
    %13 = sbr.rel (0) target = $region5
  $region4: #{mlp_net_forward.1} parent=0 // pred_region
    _
  $region5: #{mlp_net_forward.1} parent=0 // pred_fallthru
    _
  // Predicated region
  $region6: #{mlp_net_forward.1} parent=0 // pred_check
    _
  $region7: #{mlp_net_forward.1} parent=0 // pred_check_branch
    %15 = sbr.rel (0) target = $region9
  $region8: #{mlp_net_forward.1} parent=0 // pred_region
    _
  $region9: #{mlp_net_forward.1} parent=0 // pred_fallthru
    _
  // Predicated region
  $region10: #{mlp_net_forward.1} parent=0 // pred_check
    _
  $region11: #{mlp_net_forward.1} parent=0 // pred_check_branch
    %17 = sbr.rel (0) target = $region13
  $region12: #{mlp_net_forward.1} parent=0 // pred_region
    _
  $region13: #{mlp_net_forward.1} parent=0 // pred_fallthru
    _
  // Predicated region
  $region14: #{mlp_net_forward.1} parent=0 // pred_check
    _
  $region15: #{mlp_net_forward.1} parent=0 // pred_check_branch
    %19 = sbr.rel (0) target = $region17
  $region16: #{mlp_net_forward.1} parent=0 // pred_region
    _
  $region17: #{mlp_net_forward.1} parent=0 // pred_fallthru
    _
  // Predicated region
  $region18: #{mlp_net_forward.1} parent=0 // pred_check
    _
  $region19: #{mlp_net_forward.1} parent=0 // pred_check_branch
    %21 = sbr.rel (0) target = $region21
  $region20: #{mlp_net_forward.1} parent=0 // pred_region
    _
  $region21: #{mlp_net_forward.1} parent=0 // pred_fallthru
    _
  // Predicated region
  $region22: #{mlp_net_forward.1} parent=0 // pred_check
    _
  $region23: #{mlp_net_forward.1} parent=0 // pred_check_branch
    %23 = sbr.rel (0) target = $region25
  $region24: #{mlp_net_forward.1} parent=0 // pred_region
    _
  $region25: #{mlp_net_forward.1} parent=0 // pred_fallthru
    _
  // Predicated region
  $region26: #{mlp_net_forward.1} parent=0 // pred_check
    _
  $region27: #{mlp_net_forward.1} parent=0 // pred_check_branch
    %25 = sbr.rel (0) target = $region29
  $region28: #{mlp_net_forward.1} parent=0 // pred_region
    _
  $region29: #{mlp_net_forward.1} parent=0 // pred_fallthru
    _
  %v27 = vld [vmem:[%s0] sm:$0xf]
  %v28 = vld [vmem:[%s1] sm:$0xff]
  %v29 = vld [vmem:[%s1 + $0x8] sm:$0xff]
  %v30 = vld [vmem:[%s1 + $0x10] sm:$0xff]
  %v31 = vld [vmem:[%s1 + $0x18] sm:$0xff]
  %v32 = vld [vmem:[%s1 + $0x20] sm:$0xff]
  %v33 = vld [vmem:[%s1 + $0x28] sm:$0xff]
  %v34 = vld [vmem:[%s1 + $0x30] sm:$0xff]
  %v35 = vld [vmem:[%s1 + $0x38] sm:$0xff]
  %v36 = vld [vmem:[%s2] sm:$0x3]
  %v38 = vlaneseq
  %v39 = vshrl.u32 %v38, 7
  %v40 = vsub.s32 0, %v39
  %v41 = vrot.slane %v36, %v40
  %v42 = vlaneseq
  %v43 = vshrl.u32 %v42, 7
  %v44 = vsub.s32 1, %v43
  %v45 = vrot.slane %v36, %v44
  %v56 = vunpack.c.l.b16 %v28
  %v57 = vunpack.c.h.b16 %v28
  %v58 = vunpack.c.l.b16 %v29
  %v59 = vunpack.c.h.b16 %v29
  %v60 = vunpack.c.l.b16 %v30
  %v61 = vunpack.c.h.b16 %v30
  %v62 = vunpack.c.l.b16 %v31
  %v63 = vunpack.c.h.b16 %v31
  %v64 = vunpack.c.l.b16 %v32
  %v65 = vunpack.c.h.b16 %v32
  %v66 = vunpack.c.l.b16 %v33
  %v67 = vunpack.c.h.b16 %v33
  %v68 = vunpack.c.l.b16 %v34
  %v69 = vunpack.c.h.b16 %v34
  %v70 = vunpack.c.l.b16 %v35
  %v71 = vunpack.c.h.b16 %v35
  %v72 = vpack.c.b16 %v58, %v56
  %v73 = vpack.c.b16 %v59, %v57
  %v74 = vpack.c.b16 %v62, %v60
  %v75 = vpack.c.b16 %v63, %v61
  %v76 = vpack.c.b16 %v66, %v64
  %v77 = vpack.c.b16 %v67, %v65
  %v78 = vpack.c.b16 %v70, %v68
  %v79 = vpack.c.b16 %v71, %v69
  %vm88 = vcmask 523264
  %v90 = vsel %vm88, %v27, 0
  %92 = vmatprep.subr.bf16.mxu0 %v73
  %93 = vmatpush1.bf16.msra.mxu0 %v72
  %94 = vmatprep.subr.bf16.mxu0 %v75
  %95 = vmatpush1.bf16.msra.mxu0 %v74
  %96 = vmatprep.subr.bf16.mxu0 %v77
  %97 = vmatpush1.bf16.msra.mxu0 %v76
  %98 = vmatprep.subr.bf16.mxu0 %v79
  %99 = vmatpush1.bf16.msra.mxu0 %v78
  %100 = vmatprep.subr.bf16.mxu0 0
  %101 = vmatpush1.bf16.msra.mxu0 0
  %102 = vmatprep.subr.bf16.mxu0 0
  %103 = vmatpush1.bf16.msra.mxu0 0
  %104 = vmatprep.subr.bf16.mxu0 0
  %105 = vmatpush1.bf16.msra.mxu0 0
  %106 = vmatprep.subr.bf16.mxu0 0
  %107 = vmatpush1.bf16.msra.mxu0 0
  %108 = vmatprep.subr.bf16.mxu0 0
  %109 = vmatpush1.bf16.msra.mxu0 0
  %110 = vmatprep.subr.bf16.mxu0 0
  %111 = vmatpush1.bf16.msra.mxu0 0
  %112 = vmatprep.subr.bf16.mxu0 0
  %113 = vmatpush1.bf16.msra.mxu0 0
  %114 = vmatprep.subr.bf16.mxu0 0
  %115 = vmatpush1.bf16.msra.mxu0 0
  %116 = vmatprep.subr.bf16.mxu0 0
  %117 = vmatpush1.bf16.msra.mxu0 0
  %118 = vmatprep.subr.bf16.mxu0 0
  %119 = vmatpush1.bf16.msra.mxu0 0
  %120 = vmatprep.subr.bf16.mxu0 0
  %121 = vmatpush1.bf16.msra.mxu0 0
  %122 = vmatprep.subr.bf16.mxu0 0
  %123 = vmatpush1.bf16.msra.mxu0 0
  %124 = vmatprep.mubr.bf16.mxu0 0
  %125 = vmatmul.mubr.bf16.gmra.mrb[0].mxu0 %v90
  %v126 = vpop.f32.mrb[0].mxu0
  %v127 = vadd.f32 %v41, %v126
  %v128 = vpop.f32.mrb[0].mxu0
  %v129 = vadd.f32 %v45, %v128
  %v130 = vpop.f32.mrb[0].mxu0
  %v131 = vpop.f32.mrb[0].mxu0
  %132 = vdwg.mxu0
  %v133 = vmax.f32 %v127, 0.0
  %v134 = vmax.f32 %v129, 0.0
  %v135 = vpack.c.bf16 %v133, %v133
  %v136 = vpack.c.bf16 %v134, %v134
  %v137 = vld [vmem:[%s3] sm:$0xf]
  %v138 = vld [vmem:[%s3 + $0x4] sm:$0xf]
  %v139 = vld [vmem:[%s3 + $0x8] sm:$0xf]
  %v140 = vld [vmem:[%s3 + $0xc] sm:$0xf]
  %v141 = vld [vmem:[%s3 + $0x10] sm:$0xf]
  %v142 = vld [vmem:[%s3 + $0x14] sm:$0xf]
  %v143 = vld [vmem:[%s3 + $0x18] sm:$0xf]
  %v144 = vld [vmem:[%s3 + $0x1c] sm:$0xf]
  %v145 = vld [vmem:[%s3 + $0x20] sm:$0xf]
  %v146 = vld [vmem:[%s3 + $0x24] sm:$0xf]
  %v147 = vld [vmem:[%s3 + $0x28] sm:$0xf]
  %v148 = vld [vmem:[%s3 + $0x2c] sm:$0xf]
  %v149 = vld [vmem:[%s3 + $0x30] sm:$0xf]
  %v150 = vld [vmem:[%s3 + $0x34] sm:$0xf]
  %v151 = vld [vmem:[%s3 + $0x38] sm:$0xf]
  %v152 = vld [vmem:[%s3 + $0x3c] sm:$0xf]
  %v153 = vld [vmem:[%s3 + $0x40] sm:$0xf]
  %v154 = vld [vmem:[%s3 + $0x44] sm:$0xf]
  %v155 = vld [vmem:[%s3 + $0x48] sm:$0xf]
  %v156 = vld [vmem:[%s3 + $0x4c] sm:$0xf]
  %v157 = vld [vmem:[%s3 + $0x50] sm:$0xf]
  %v158 = vld [vmem:[%s3 + $0x54] sm:$0xf]
  %v159 = vld [vmem:[%s3 + $0x58] sm:$0xf]
  %v160 = vld [vmem:[%s3 + $0x5c] sm:$0xf]
  %v161 = vld [vmem:[%s3 + $0x60] sm:$0xf]
  %v162 = vld [vmem:[%s3 + $0x64] sm:$0xf]
  %v163 = vld [vmem:[%s3 + $0x68] sm:$0xf]
  %v164 = vld [vmem:[%s3 + $0x6c] sm:$0xf]
  %v165 = vld [vmem:[%s3 + $0x70] sm:$0xf]
  %v166 = vld [vmem:[%s3 + $0x74] sm:$0xf]
  %v167 = vld [vmem:[%s3 + $0x78] sm:$0xf]
  %v168 = vld [vmem:[%s3 + $0x7c] sm:$0xf]
  %v169 = vld [vmem:[%s4] sm:$0x1]
  %v171 = vlaneseq
  %v172 = vshrl.u32 %v171, 7
  %v173 = vsub.s32 0, %v172
  %v174 = vrot.slane %v169, %v173
  %v208 = vunpack.c.l.b16 %v137
  %v209 = vunpack.c.l.b16 %v138
  %v210 = vunpack.c.l.b16 %v139
  %v211 = vunpack.c.l.b16 %v140
  %v212 = vunpack.c.l.b16 %v141
  %v213 = vunpack.c.l.b16 %v142
  %v214 = vunpack.c.l.b16 %v143
  %v215 = vunpack.c.l.b16 %v144
  %v216 = vunpack.c.l.b16 %v145
  %v217 = vunpack.c.l.b16 %v146
  %v218 = vunpack.c.l.b16 %v147
  %v219 = vunpack.c.l.b16 %v148
  %v220 = vunpack.c.l.b16 %v149
  %v221 = vunpack.c.l.b16 %v150
  %v222 = vunpack.c.l.b16 %v151
  %v223 = vunpack.c.l.b16 %v152
  %v224 = vunpack.c.l.b16 %v153
  %v225 = vunpack.c.l.b16 %v154
  %v226 = vunpack.c.l.b16 %v155
  %v227 = vunpack.c.l.b16 %v156
  %v228 = vunpack.c.l.b16 %v157
  %v229 = vunpack.c.l.b16 %v158
  %v230 = vunpack.c.l.b16 %v159
  %v231 = vunpack.c.l.b16 %v160
  %v232 = vunpack.c.l.b16 %v161
  %v233 = vunpack.c.l.b16 %v162
  %v234 = vunpack.c.l.b16 %v163
  %v235 = vunpack.c.l.b16 %v164
  %v236 = vunpack.c.l.b16 %v165
  %v237 = vunpack.c.l.b16 %v166
  %v238 = vunpack.c.l.b16 %v167
  %v239 = vunpack.c.l.b16 %v168
  %v240 = vpack.c.b16 %v209, %v208
  %v241 = vpack.c.b16 %v211, %v210
  %v242 = vpack.c.b16 %v213, %v212
  %v243 = vpack.c.b16 %v215, %v214
  %v244 = vpack.c.b16 %v217, %v216
  %v245 = vpack.c.b16 %v219, %v218
  %v246 = vpack.c.b16 %v221, %v220
  %v247 = vpack.c.b16 %v223, %v222
  %v248 = vpack.c.b16 %v225, %v224
  %v249 = vpack.c.b16 %v227, %v226
  %v250 = vpack.c.b16 %v229, %v228
  %v251 = vpack.c.b16 %v231, %v230
  %v252 = vpack.c.b16 %v233, %v232
  %v253 = vpack.c.b16 %v235, %v234
  %v254 = vpack.c.b16 %v237, %v236
  %v255 = vpack.c.b16 %v239, %v238
  %272 = vmatprep.subr.bf16.mxu0 0
  %273 = vmatpush1.bf16.msra.mxu0 %v240
  %274 = vmatprep.subr.bf16.mxu0 0
  %275 = vmatpush1.bf16.msra.mxu0 %v241
  %276 = vmatprep.subr.bf16.mxu0 0
  %277 = vmatpush1.bf16.msra.mxu0 %v242
  %278 = vmatprep.subr.bf16.mxu0 0
  %279 = vmatpush1.bf16.msra.mxu0 %v243
  %280 = vmatprep.subr.bf16.mxu0 0
  %281 = vmatpush1.bf16.msra.mxu0 %v244
  %282 = vmatprep.subr.bf16.mxu0 0
  %283 = vmatpush1.bf16.msra.mxu0 %v245
  %284 = vmatprep.subr.bf16.mxu0 0
  %285 = vmatpush1.bf16.msra.mxu0 %v246
  %286 = vmatprep.subr.bf16.mxu0 0
  %287 = vmatpush1.bf16.msra.mxu0 %v247
  %288 = vmatprep.subr.bf16.mxu0 0
  %289 = vmatpush1.bf16.msra.mxu0 %v248
  %290 = vmatprep.subr.bf16.mxu0 0
  %291 = vmatpush1.bf16.msra.mxu0 %v249
  %292 = vmatprep.subr.bf16.mxu0 0
  %293 = vmatpush1.bf16.msra.mxu0 %v250
  %294 = vmatprep.subr.bf16.mxu0 0
  %295 = vmatpush1.bf16.msra.mxu0 %v251
  %296 = vmatprep.subr.bf16.mxu0 0
  %297 = vmatpush1.bf16.msra.mxu0 %v252
  %298 = vmatprep.subr.bf16.mxu0 0
  %299 = vmatpush1.bf16.msra.mxu0 %v253
  %300 = vmatprep.subr.bf16.mxu0 0
  %301 = vmatpush1.bf16.msra.mxu0 %v254
  %302 = vmatprep.subr.bf16.mxu0 0
  %303 = vmatpush1.bf16.msra.mxu0 %v255
  %304 = vmatprep.mubr.bf16.mxu0 %v136
  %305 = vmatmul.mubr.bf16.gmra.mrb[0].mxu0 %v135
  %v306 = vpop.f32.mrb[0].mxu0
  %v307 = vadd.f32 %v174, %v306
  %v308 = vpop.f32.mrb[0].mxu0
  %v309 = vpop.f32.mrb[0].mxu0
  %v310 = vpop.f32.mrb[0].mxu0
  %311 = vdwg.mxu0
  %v312 = vmax.f32 %v307, 0.0
  %v313 = vpack.c.bf16 %v312, %v312
  %v314 = vld [vmem:[%s5] sm:$0xf]
  %v315 = vld [vmem:[%s5 + $0x4] sm:$0xf]
  %v316 = vld [vmem:[%s5 + $0x8] sm:$0xf]
  %v317 = vld [vmem:[%s5 + $0xc] sm:$0xf]
  %v318 = vld [vmem:[%s5 + $0x10] sm:$0xf]
  %v319 = vld [vmem:[%s5 + $0x14] sm:$0xf]
  %v320 = vld [vmem:[%s5 + $0x18] sm:$0xf]
  %v321 = vld [vmem:[%s5 + $0x1c] sm:$0xf]
  %v322 = vld [vmem:[%s5 + $0x20] sm:$0xf]
  %v323 = vld [vmem:[%s5 + $0x24] sm:$0xf]
  %v324 = vld [vmem:[%s5 + $0x28] sm:$0xf]
  %v325 = vld [vmem:[%s5 + $0x2c] sm:$0xf]
  %v326 = vld [vmem:[%s5 + $0x30] sm:$0xf]
  %v327 = vld [vmem:[%s5 + $0x34] sm:$0xf]
  %v328 = vld [vmem:[%s5 + $0x38] sm:$0xf]
  %v329 = vld [vmem:[%s5 + $0x3c] sm:$0xf]
  %v330 = vld [vmem:[%s6] sm:$0x1]
  %v332 = vlaneseq
  %v333 = vshrl.u32 %v332, 7
  %v334 = vsub.s32 0, %v333
  %v335 = vrot.slane %v330, %v334
  %v353 = vunpack.c.l.b16 %v314
  %v354 = vunpack.c.l.b16 %v315
  %v355 = vunpack.c.l.b16 %v316
  %v356 = vunpack.c.l.b16 %v317
  %v357 = vunpack.c.l.b16 %v318
  %v358 = vunpack.c.l.b16 %v319
  %v359 = vunpack.c.l.b16 %v320
  %v360 = vunpack.c.l.b16 %v321
  %v361 = vunpack.c.l.b16 %v322
  %v362 = vunpack.c.l.b16 %v323
  %v363 = vunpack.c.l.b16 %v324
  %v364 = vunpack.c.l.b16 %v325
  %v365 = vunpack.c.l.b16 %v326
  %v366 = vunpack.c.l.b16 %v327
  %v367 = vunpack.c.l.b16 %v328
  %v368 = vunpack.c.l.b16 %v329
  %v369 = vpack.c.b16 %v354, %v353
  %v370 = vpack.c.b16 %v356, %v355
  %v371 = vpack.c.b16 %v358, %v357
  %v372 = vpack.c.b16 %v360, %v359
  %v373 = vpack.c.b16 %v362, %v361
  %v374 = vpack.c.b16 %v364, %v363
  %v375 = vpack.c.b16 %v366, %v365
  %v376 = vpack.c.b16 %v368, %v367
  %385 = vmatprep.subr.bf16.mxu0 0
  %386 = vmatpush1.bf16.msra.mxu0 %v369
  %387 = vmatprep.subr.bf16.mxu0 0
  %388 = vmatpush1.bf16.msra.mxu0 %v370
  %389 = vmatprep.subr.bf16.mxu0 0
  %390 = vmatpush1.bf16.msra.mxu0 %v371
  %391 = vmatprep.subr.bf16.mxu0 0
  %392 = vmatpush1.bf16.msra.mxu0 %v372
  %393 = vmatprep.subr.bf16.mxu0 0
  %394 = vmatpush1.bf16.msra.mxu0 %v373
  %395 = vmatprep.subr.bf16.mxu0 0
  %396 = vmatpush1.bf16.msra.mxu0 %v374
  %397 = vmatprep.subr.bf16.mxu0 0
  %398 = vmatpush1.bf16.msra.mxu0 %v375
  %399 = vmatprep.subr.bf16.mxu0 0
  %400 = vmatpush1.bf16.msra.mxu0 %v376
  %401 = vmatprep.subr.bf16.mxu0 0
  %402 = vmatpush1.bf16.msra.mxu0 0
  %403 = vmatprep.subr.bf16.mxu0 0
  %404 = vmatpush1.bf16.msra.mxu0 0
  %405 = vmatprep.subr.bf16.mxu0 0
  %406 = vmatpush1.bf16.msra.mxu0 0
  %407 = vmatprep.subr.bf16.mxu0 0
  %408 = vmatpush1.bf16.msra.mxu0 0
  %409 = vmatprep.subr.bf16.mxu0 0
  %410 = vmatpush1.bf16.msra.mxu0 0
  %411 = vmatprep.subr.bf16.mxu0 0
  %412 = vmatpush1.bf16.msra.mxu0 0
  %413 = vmatprep.subr.bf16.mxu0 0
  %414 = vmatpush1.bf16.msra.mxu0 0
  %415 = vmatprep.subr.bf16.mxu0 0
  %416 = vmatpush1.bf16.msra.mxu0 0
  %417 = vmatprep.mubr.bf16.mxu0 0
  %418 = vmatmul.mubr.bf16.gmra.mrb[0].mxu0 %v313
  %v419 = vpop.f32.mrb[0].mxu0
  %v420 = vadd.f32 %v335, %v419
  %v421 = vpop.f32.mrb[0].mxu0
  %v422 = vpop.f32.mrb[0].mxu0
  %v423 = vpop.f32.mrb[0].mxu0
  %424 = vdwg.mxu0
  %v425 = vlaneseq
  %v426 = vand.u32 %v425, 127
  %vm427 = vcmp.lt.s32.totalorder %v426, 10
  %v428 = vsel %vm427, %v420, -inf
  %429 = vmax.xlane.f32.xlu0 %v428
  %v430 = vpop.xlane.xlu0 %429
  %v431 = vsub.f32 %v420, %v430
  %v432 = vsel %vm427, %v431, -inf
  %v433 = vmul.f32 %v432, 1.442695
  %v434 = vpow.pop %v433
  %435 = vadd.xlane.f32.xlu0 %v434
  %v436 = vpop.xlane.xlu0 %435
  %v437 = vlog2.pop %v436
  %v438 = vmul.f32 %v437, 0.6931472
  %v439 = vsub.f32 %v432, %v438
  %vm440 = vcmp.eq.s32.totalorder %v426, 10
  %v441 = vtanh.pop %v420
  %v442 = vsel %vm440, %v441, 0.0
  %v443 = vsel %vm427, %v439, %v442
  %444 = vst [vmem:[%s7] sm:$0xff] %v443
  // Predicated region
  $region30: #{mlp_net_forward.1} parent=0 // pred_check
    _
  $region31: #{mlp_net_forward.1} parent=0 // pred_check_branch
    %446 = sbr.rel (0) target = $region33
  $region32: #{mlp_net_forward.1} parent=0 // pred_region
    _
  $region33: #{mlp_net_forward.1} parent=0 // pred_fallthru
    _
  // Predicated region
  $region34: #{mlp_net_forward.1} parent=0 // pred_check
    _
  $region35: #{mlp_net_forward.1} parent=0 // pred_check_branch
    %448 = sbr.rel (0) target = $region37
  $region36: #{mlp_net_forward.1} parent=0 // pred_region
    _
  $region37: #{mlp_net_forward.1} parent=0 // pred_fallthru
    _

</llo_original>
